<compile_context>
chip_gen: v7x
topology: tpu7x:2x2x1
jax: 0.10.0
libtpu: 0.0.40
codegen_flags: <defaults>
</compile_context>

<pallas_src>
import functools

import jax
import jax.numpy as jnp
from jax.experimental import pallas as pl
from jax.experimental.pallas import tpu as pltpu

_ALPHA_NEG = 1.0   # alpha[0]
_ALPHA_POS = 3.0   # alpha[1]
_GAMMA = 2
_EPSILON = 1e-9
_LANES = 128


def _focal_kernel(prob_ref, target_ref, out_ref, acc_ref, *,
                  tile_rows, total_rows, apply_mask):
    j = pl.program_id(1)

    @pl.when(j == 0)
    def _init():
        acc_ref[...] = jnp.zeros_like(acc_ref)

    prob = prob_ref[...].astype(jnp.float32)      # cast in-kernel (free, hidden under DMA)
    target = target_ref[...].astype(jnp.float32)

    is_pos = target == 1.0
    pt = jnp.where(is_pos, prob, 1.0 - prob)
    alpha = jnp.where(is_pos, jnp.float32(_ALPHA_POS), jnp.float32(_ALPHA_NEG))
    log_pt = jnp.log(pt + jnp.float32(_EPSILON))  # EUP slot
    one_minus_pt = 1.0 - pt
    focal = one_minus_pt * one_minus_pt           # gamma == 2
    focal_loss = -alpha * focal * log_pt

    if apply_mask:
        # Zero out rows beyond the real array extent (partial / overhanging
        # blocks). Uses the *intended* (unclamped) block index so fully
        # out-of-range duplicate blocks contribute exactly zero.
        c = pl.program_id(0)
        row_base = (c * pl.num_programs(1) + j) * tile_rows
        row_idx = jax.lax.broadcasted_iota(jnp.int32, focal_loss.shape, 0) + row_base
        focal_loss = jnp.where(row_idx < total_rows, focal_loss, 0.0)

    # Vector accumulator: per-step work is a single elementwise VPU add.
    acc_ref[...] += focal_loss

    @pl.when(j == pl.num_programs(1) - 1)
    def _fin():
        # One cross-lane reduction per slice, in the epilogue only.
        out_ref[0, 0] = jnp.sum(acc_ref[...])


def binary_focal_loss(prob, target, *, tile_rows=4096, num_slices=2):
    """Pallas TPU implementation of BinaryFocalLoss.forward (returns f32 scalar)."""
    assert prob.shape == target.shape, "prob and target must have the same shape"
    n_elems = prob.size

    # Flatten (free reshape of a contiguous array); keep original dtypes in HBM.
    flat_p = prob.reshape(-1)
    flat_t = target.reshape(-1)

    # Only if numel is not a multiple of 128 do we pad (rare; tiny loss-neutral
    # tail: prob=1, target=1 -> focal == 0 exactly).
    lane_pad = (-n_elems) % _LANES
    if lane_pad:
        # TODO(synk): XLA concat still copies the whole buffer in this ragged
        # case; could be avoided with a separate tail kernel if it matters.
        flat_p = jnp.concatenate([flat_p, jnp.ones((lane_pad,), flat_p.dtype)])
        flat_t = jnp.concatenate([flat_t, jnp.ones((lane_pad,), flat_t.dtype)])

    rows = flat_p.shape[0] // _LANES
    p2 = flat_p.reshape(rows, _LANES)   # free reshape, lane-dense slab
    t2 = flat_t.reshape(rows, _LANES)

    tile_eff = min(tile_rows, rows)                     # full-array block if small
    blocks_total = pl.cdiv(rows, tile_eff)
    n_slices = num_slices if blocks_total >= num_slices else 1
    steps = pl.cdiv(blocks_total, n_slices)

    # Does the (n_slices x steps) grid cover more rows than physically exist?
    apply_mask = (n_slices * steps * tile_eff) != rows
    need_clamp = (n_slices * steps) != blocks_total

    if need_clamp:
        def in_map(c, j):
            # Clamp so the DMA never targets a block index past the array;
            # the duplicate block is fully masked out in the kernel.
            return (jnp.minimum(c * steps + j, blocks_total - 1), 0)
    else:
        def in_map(c, j):
            return (c * steps + j, 0)

    kernel = functools.partial(
        _focal_kernel, tile_rows=tile_eff, total_rows=rows, apply_mask=apply_mask)

    partials = pl.pallas_call(
        kernel,
        out_shape=jax.ShapeDtypeStruct((n_slices, 1), jnp.float32),
        grid_spec=pltpu.PrefetchScalarGridSpec(
            num_scalar_prefetch=0,
            grid=(n_slices, steps),
            in_specs=[
                pl.BlockSpec((tile_eff, _LANES), in_map),
                pl.BlockSpec((tile_eff, _LANES), in_map),
            ],
            out_specs=pl.BlockSpec(
                (1, 1), lambda c, j: (c, 0), memory_space=pltpu.SMEM),
            scratch_shapes=[pltpu.VMEM((tile_eff, _LANES), jnp.float32)],
        ),
        compiler_params=pltpu.CompilerParams(
            dimension_semantics=("parallel", "arbitrary"),
            vmem_limit_bytes=32 * 1024 * 1024,
        ),
    )(p2, t2)

    # Tiny host-side combine: sum per-slice partials, normalize by true count.
    return jnp.sum(partials) / jnp.float32(n_elems)


def binary_focal_loss_ref(prob, target):
    """Pure-JAX reference matching the PyTorch module."""
    prob = prob.astype(jnp.float32)
    target = target.astype(jnp.float32)
    is_pos = target == 1.0
    pt = jnp.where(is_pos, prob, 1.0 - prob)
    alpha = jnp.where(is_pos, _ALPHA_POS, _ALPHA_NEG)
    log_pt = jnp.log(pt + _EPSILON)
    focal = (1.0 - pt) ** _GAMMA
    return jnp.mean(-1.0 * alpha * focal * log_pt)


if __name__ == "__main__":
    key = jax.random.PRNGKey(0)
    kp, kt = jax.random.split(key)

    # Small NCHW-shaped inputs (per-pixel binary segmentation probabilities).
    shape = (2, 4, 16, 16)
    prob = jax.random.uniform(kp, shape, dtype=jnp.float32, minval=1e-3, maxval=1.0 - 1e-3)
    target = jax.random.bernoulli(kt, p=0.3, shape=shape).astype(jnp.float32)

    loss = jax.block_until_ready(binary_focal_loss(prob, target))
    ref = jax.block_until_ready(binary_focal_loss_ref(prob, target))
    assert jnp.allclose(loss, ref, rtol=1e-5, atol=1e-6), (loss, ref)

    # Also exercise the multi-block / two-slice / masked-partial-tile path on a
    # small shape by forcing a tiny tile (18 rows, tile of 8 -> 3 blocks).
    shape2 = (2, 4, 16, 18)
    kp2, kt2 = jax.random.split(jax.random.PRNGKey(1))
    prob2 = jax.random.uniform(kp2, shape2, dtype=jnp.float32, minval=1e-3, maxval=1.0 - 1e-3)
    target2 = jax.random.bernoulli(kt2, p=0.3, shape=shape2).astype(jnp.float32)
    loss2 = jax.block_until_ready(binary_focal_loss(prob2, target2, tile_rows=8))
    ref2 = jax.block_until_ready(binary_focal_loss_ref(prob2, target2))
    assert jnp.allclose(loss2, ref2, rtol=1e-5, atol=1e-6), (loss2, ref2)

    print("KERNEL_OK")
</pallas_src>

<mosaic_0001>
module attributes {stable_mosaic.version = 11 : i64} {
  func.func @_focal_kernel(%arg0: i32, %arg1: i32, %arg2: memref<16x128xf32, #tpu.memory_space<vmem>>, %arg3: memref<16x128xf32, #tpu.memory_space<vmem>>, %arg4: memref<1x1xf32, #tpu.memory_space<smem>>, %arg5: memref<16x128xf32, #tpu.memory_space<vmem>>) attributes {dimension_semantics = [#tpu.dimension_semantics<parallel>, #tpu.dimension_semantics<arbitrary>], iteration_bounds = array<i64: 1, 1>, scalar_prefetch = 0 : i64, scratch_operands = 1 : i64, tpu.core_type = #tpu.core_type<tc>, window_params = [{transform_indices = @transform_0, window_bounds = array<i64: 16, 128>}, {transform_indices = @transform_1, window_bounds = array<i64: 16, 128>}, {transform_indices = @transform_2, window_bounds = array<i64: 1, 1>}]} {
    %c0_i32 = arith.constant 0 : i32
    %0 = arith.cmpi eq, %arg1, %c0_i32 : i32
    %1 = arith.extui %0 : i1 to i32
    %c0_i32_0 = arith.constant 0 : i32
    %2 = arith.cmpi ne, %1, %c0_i32_0 : i32
    scf.if %2 {
      %cst_16 = arith.constant 0.000000e+00 : f32
      %29 = vector.broadcast %cst_16 : f32 to vector<16x128xf32>
      %c0_17 = arith.constant 0 : index
      %c0_18 = arith.constant 0 : index
      %30 = vector.load %arg5[%c0_17, %c0_18] : memref<16x128xf32, #tpu.memory_space<vmem>>, vector<16x128xf32>
      tpu.vector_store %arg5[%c0_17, %c0_18], %29 {strides = array<i32>} : memref<16x128xf32, #tpu.memory_space<vmem>>, vector<16x128xf32>,
    } else {
    }
    %c0 = arith.constant 0 : index
    %c0_1 = arith.constant 0 : index
    %3 = vector.load %arg2[%c0, %c0_1] : memref<16x128xf32, #tpu.memory_space<vmem>>, vector<16x128xf32>
    %c0_2 = arith.constant 0 : index
    %c0_3 = arith.constant 0 : index
    %4 = vector.load %arg3[%c0_2, %c0_3] : memref<16x128xf32, #tpu.memory_space<vmem>>, vector<16x128xf32>
    %cst = arith.constant 1.000000e+00 : f32
    %5 = vector.broadcast %cst : f32 to vector<16x128xf32>
    %6 = arith.cmpf oeq, %4, %5 : vector<16x128xf32>
    %cst_4 = arith.constant 1.000000e+00 : f32
    %7 = vector.broadcast %cst_4 : f32 to vector<16x128xf32>
    %8 = arith.subf %7, %3 : vector<16x128xf32>
    %9 = arith.select %6, %3, %8 : vector<16x128xi1>, vector<16x128xf32>
    %cst_5 = arith.constant 3.000000e+00 : f32
    %cst_6 = arith.constant 1.000000e+00 : f32
    %10 = vector.broadcast %cst_5 : f32 to vector<16x128xf32>
    %11 = vector.broadcast %cst_6 : f32 to vector<16x128xf32>
    %12 = arith.select %6, %10, %11 : vector<16x128xi1>, vector<16x128xf32>
    %cst_7 = arith.constant 9.99999971E-10 : f32
    %13 = vector.broadcast %cst_7 : f32 to vector<16x128xf32>
    %14 = arith.addf %9, %13 : vector<16x128xf32>
    %15 = math.log %14 : vector<16x128xf32>
    %cst_8 = arith.constant 1.000000e+00 : f32
    %16 = vector.broadcast %cst_8 : f32 to vector<16x128xf32>
    %17 = arith.subf %16, %9 : vector<16x128xf32>
    %18 = arith.mulf %17, %17 : vector<16x128xf32>
    %cst_9 = arith.constant 0.000000e+00 : f32
    %19 = vector.broadcast %cst_9 : f32 to vector<16x128xf32>
    %20 = arith.subf %19, %12 : vector<16x128xf32>
    %21 = arith.mulf %20, %18 : vector<16x128xf32>
    %22 = arith.mulf %21, %15 : vector<16x128xf32>
    %c0_10 = arith.constant 0 : index
    %c0_11 = arith.constant 0 : index
    %23 = vector.load %arg5[%c0_10, %c0_11] : memref<16x128xf32, #tpu.memory_space<vmem>>, vector<16x128xf32>
    %24 = arith.addf %23, %22 : vector<16x128xf32>
    %c0_12 = arith.constant 0 : index
    %c0_13 = arith.constant 0 : index
    %25 = vector.load %arg5[%c0_12, %c0_13] : memref<16x128xf32, #tpu.memory_space<vmem>>, vector<16x128xf32>
    tpu.vector_store %arg5[%c0_12, %c0_13], %24 {strides = array<i32>} : memref<16x128xf32, #tpu.memory_space<vmem>>, vector<16x128xf32>,
    %c0_i32_14 = arith.constant 0 : i32
    %26 = arith.cmpi eq, %arg1, %c0_i32_14 : i32
    %27 = arith.extui %26 : i1 to i32
    %c0_i32_15 = arith.constant 0 : i32
    %28 = arith.cmpi ne, %27, %c0_i32_15 : i32
    scf.if %28 {
      %c0_16 = arith.constant 0 : index
      %c0_17 = arith.constant 0 : index
      %29 = vector.load %arg5[%c0_16, %c0_17] : memref<16x128xf32, #tpu.memory_space<vmem>>, vector<16x128xf32>
      %30 = vector.shape_cast %29 : vector<16x128xf32> to vector<1x16x128xf32>
      %cst_18 = arith.constant dense<0.000000e+00> : vector<1xf32>
      %31 = vector.multi_reduction <add>, %30, %cst_18 [1, 2] : vector<1x16x128xf32> to vector<1xf32>
      %32 = vector.shape_cast %31 : vector<1xf32> to vector<1x1x1xf32>
      %33 = vector.extract %32[0, 0, 0] : f32 from vector<1x1x1xf32>
      %c0_19 = arith.constant 0 : index
      %c0_20 = arith.constant 0 : index
      %34 = memref.load %arg4[%c0_19, %c0_20] : memref<1x1xf32, #tpu.memory_space<smem>>
      memref.store %33, %arg4[%c0_19, %c0_20] : memref<1x1xf32, #tpu.memory_space<smem>>
    } else {
    }
    return
  }
  func.func @transform_0(%arg0: i32, %arg1: i32) -> (i32, i32) {
    %c1_i32 = arith.constant 1 : i32
    %0 = arith.muli %arg0, %c1_i32 : i32
    %1 = arith.addi %0, %arg1 : i32
    %c0_i32 = arith.constant 0 : i32
    %c0_i32_0 = arith.constant 0 : i32
    return %1, %c0_i32 : i32, i32
  }
  func.func @transform_1(%arg0: i32, %arg1: i32) -> (i32, i32) {
    %c1_i32 = arith.constant 1 : i32
    %0 = arith.muli %arg0, %c1_i32 : i32
    %1 = arith.addi %0, %arg1 : i32
    %c0_i32 = arith.constant 0 : i32
    %c0_i32_0 = arith.constant 0 : i32
    return %1, %c0_i32 : i32, i32
  }
  func.func @transform_2(%arg0: i32, %arg1: i32) -> (i32, i32) {
    %c0_i32 = arith.constant 0 : i32
    %c0_i32_0 = arith.constant 0 : i32
    return %arg0, %c0_i32 : i32, i32
  }
}

</mosaic_0001>

<llo_original>
// kernel: tpu_custom_call.1
$region0: #{tpu_custom_call.1}
  #allocation0 [shape = 'u32[]', space=smem, size = 0x4, offset = 0x4, fixed_abs, tag = 'smem constant byte address 0x4 - core index']
  #allocation1 [shape = 'u32[144,128]{1,0:T(1,128)}', space=vmem, size = 0x12000, scoped, tag = 'internal scratch']
  #allocation2 [shape = 'f32[16,128]{1,0:T(8,128)}', space=vmem, size = 0x2000, scoped, tag = 'scratch operand']
  %s0 = inlined_call_operand.hbm [shape: f32[16,128], index: 0, kind: input, shape index: {}]
  %s1 = inlined_call_operand.hbm [shape: f32[16,128], index: 1, kind: input, shape index: {}]
  %s2 = inlined_call_operand.hbm [shape: f32[1,1], index: 2, kind: output, shape index: {}]
  %s3 = sld [smem:[#allocation0]]
  $region34: #{tpu_custom_call.1} parent=0
    _
  %s5 = ssub.s32 1, %s3
  %s6 = scalar_select 0, %s5, %s3
  $region1: #{tpu_custom_call.1} parent=0
    #allocation3 [shape = 'u8[8192]{0}', space=vmem, size = 0x2000, scoped, tag = 'input window, operand 0, single buffered']
    #allocation4 [shape = 's32[1]{0}', space=sflag, size = 0x4, scoped, tag = 'scoped memory for tpu_custom_call.1']
    #allocation5 [shape = 's32[1]{0}', space=sflag, size = 0x4, scoped, tag = 'scoped memory for tpu_custom_call.1']
    #allocation6 [shape = 'u8[8192]{0}', space=vmem, size = 0x2000, scoped, tag = 'input window, operand 1, single buffered']
    #allocation7 [shape = 's32[1]{0}', space=sflag, size = 0x4, scoped, tag = 'scoped memory for tpu_custom_call.1']
    #allocation8 [shape = 'u8[512]{0}', space=smem, size = 0x200, scoped, tag = 'output window, operand 0, single buffered']
    %7 = vsyncpa [#allocation4], 0
    %8 = vsyncpa [#allocation7], 0
    %9 = vsyncpa [#allocation5], 0
    // Predicated region
    $region2: #{tpu_custom_call.1} parent=1 // pred_check
      _
    $region3: #{tpu_custom_call.1} parent=1 // pred_check_branch
      %11 = sbr.rel (0) target = $region5
    $region4: #{tpu_custom_call.1} parent=1 // pred_region
      %s12 = sadd.s32 0, 0
      %s13 = smul.u32 2, %s12
      %s15 = ssub.s32 256, 256
      %16 = vsyncadd [#allocation4], %s15
      %s17 = smul.addr %s13, 128
      %s18 = scalar_lea.hbm %s0, %s17
      %s19 = sshll.u32 [#allocation3], 4
      %s20 = int_to_ptr.vmem [resolvable:$true] %s19
      %25 = dma.hbm_to_vmem [thread:$0]  %s18, 256, %s20, [#allocation4], 128, 128, 8
    $region5: #{tpu_custom_call.1} parent=1 // pred_fallthru
      _
    // Predicated region
    $region6: #{tpu_custom_call.1} parent=1 // pred_check
      _
    $region7: #{tpu_custom_call.1} parent=1 // pred_check_branch
      %27 = sbr.rel (0) target = $region9
    $region8: #{tpu_custom_call.1} parent=1 // pred_region
      %s28 = sadd.s32 0, 0
      %s29 = smul.u32 2, %s28
      %s31 = ssub.s32 256, 256
      %32 = vsyncadd [#allocation7], %s31
      %s33 = smul.addr %s29, 128
      %s34 = scalar_lea.hbm %s1, %s33
      %s35 = sshll.u32 [#allocation6], 4
      %s36 = int_to_ptr.vmem [resolvable:$true] %s35
      %41 = dma.hbm_to_vmem [thread:$0]  %s34, 256, %s36, [#allocation7], 128, 128, 8
    $region9: #{tpu_custom_call.1} parent=1 // pred_fallthru
      _
    // Predicated region
    $region10: #{tpu_custom_call.1} parent=1 // pred_check
      _
    $region11: #{tpu_custom_call.1} parent=1 // pred_check_branch
      %43 = sbr.rel (0) target = $region13
    $region12: #{tpu_custom_call.1} parent=1 // pred_region
      %44 = dma.done [#allocation4], 256
    $region13: #{tpu_custom_call.1} parent=1 // pred_fallthru
      _
    // Predicated region
    $region14: #{tpu_custom_call.1} parent=1 // pred_check
      _
    $region15: #{tpu_custom_call.1} parent=1 // pred_check_branch
      %46 = sbr.rel (0) target = $region17
    $region16: #{tpu_custom_call.1} parent=1 // pred_region
      %47 = dma.done [#allocation7], 256
    $region17: #{tpu_custom_call.1} parent=1 // pred_fallthru
      _
    %s48 = sadd.s32 0, 0
    %s49 = smul.u32 2, %s48
    %s50 = sadd.s32 0, 0
    %s51 = smul.u32 2, %s50
    %p52 = scmp.eq.s32.totalorder 0, 0
    // Predicated region
    $region18: #{tpu_custom_call.1} parent=1 // pred_check
      %p53 = pneg %p52
    $region19: #{tpu_custom_call.1} parent=1 // pred_check_branch
      %55 = sbr.rel (%p53) target = $region21
    $region20: #{tpu_custom_call.1} parent=1 // pred_region
      %56 = vst [vmem:[#allocation2] sm:$0xff] 0.0
      %57 = vst [vmem:[#allocation2 + $0x8] sm:$0xff] 0.0
    $region21: #{tpu_custom_call.1} parent=1 // pred_fallthru
      _
    %v58 = vld [vmem:[#allocation3] sm:$0xff]
    %v59 = vld [vmem:[#allocation3 + $0x8] sm:$0xff]
    %v60 = vld [vmem:[#allocation6] sm:$0xff]
    %v61 = vld [vmem:[#allocation6 + $0x8] sm:$0xff]
    %vm62 = vcmp.eq.f32.partialorder %v60, 1.0
    %vm63 = vcmp.eq.f32.partialorder %v61, 1.0
    %v64 = vsub.f32 1.0, %v58
    %v65 = vsub.f32 1.0, %v59
    %v66 = vsel %vm62, %v58, %v64
    %v67 = vsel %vm63, %v59, %v65
    %v68 = vsel %vm62, 3.0, 1.0
    %v69 = vsel %vm63, 3.0, 1.0
    %v70 = vadd.f32 %v66, 1e-09
    %v71 = vadd.f32 %v67, 1e-09
    %v72 = vlog2.pop %v70
    %v73 = vmul.f32 %v72, 0.6931472
    %v74 = vlog2.pop %v71
    %v75 = vmul.f32 %v74, 0.6931472
    %v76 = vsub.f32 1.0, %v66
    %v77 = vsub.f32 1.0, %v67
    %v78 = vmul.f32 %v76, %v76
    %v79 = vmul.f32 %v77, %v77
    %v80 = vsub.f32 0.0, %v68
    %v81 = vsub.f32 0.0, %v69
    %v82 = vmul.f32 %v80, %v78
    %v83 = vmul.f32 %v81, %v79
    %v84 = vmul.f32 %v82, %v73
    %v85 = vmul.f32 %v83, %v75
    %v86 = vld [vmem:[#allocation2] sm:$0xff]
    %v87 = vld [vmem:[#allocation2 + $0x8] sm:$0xff]
    %v88 = vadd.f32 %v86, %v84
    %v89 = vadd.f32 %v87, %v85
    %90 = vst [vmem:[#allocation2] sm:$0xff] %v88
    %91 = vst [vmem:[#allocation2 + $0x8] sm:$0xff] %v89
    // Predicated region
    $region22: #{tpu_custom_call.1} parent=1 // pred_check
      %p92 = pneg %p52
    $region23: #{tpu_custom_call.1} parent=1 // pred_check_branch
      %94 = sbr.rel (%p92) target = $region25
    $region24: #{tpu_custom_call.1} parent=1 // pred_region
      %v95 = vld [vmem:[#allocation2] sm:$0xff]
      %v96 = vld [vmem:[#allocation2 + $0x8] sm:$0xff]
      %v97 = vadd.f32 %v95, %v96
      %98 = vadd.xlane.f32.xlu0 %v97
      %v99 = vpop.xlane.xlu0 %98
      %v100 = vrot.slane %v99, 4
      %v101 = vadd.f32 %v99, %v100
      %v102 = vrot.slane %v101, 2
      %v103 = vadd.f32 %v101, %v102
      %v104 = vrot.slane %v103, 1
      %v105 = vadd.f32 %v103, %v104
      %s106 = vtos %v105
      %s107 = scalar_lea.smem [#allocation8], 0
      %108 = sst [smem:[%s107]] %s106
    $region25: #{tpu_custom_call.1} parent=1 // pred_fallthru
      _
    // Predicated region
    $region26: #{tpu_custom_call.1} parent=1 // pred_check
      _
    $region27: #{tpu_custom_call.1} parent=1 // pred_check_branch
      %110 = sbr.rel (0) target = $region29
    $region28: #{tpu_custom_call.1} parent=1 // pred_region
      %s112 = ssub.s32 16, 16
      %113 = vsyncadd [#allocation5], %s112
      %116 = dma.smem_to_hbm [#allocation8], 16, %s2, [#allocation5]
    $region29: #{tpu_custom_call.1} parent=1 // pred_fallthru
      _
    // Predicated region
    $region30: #{tpu_custom_call.1} parent=1 // pred_check
      _
    $region31: #{tpu_custom_call.1} parent=1 // pred_check_branch
      %118 = sbr.rel (0) target = $region33
    $region32: #{tpu_custom_call.1} parent=1 // pred_region
      %119 = dma.done [#allocation5], 16
    $region33: #{tpu_custom_call.1} parent=1 // pred_fallthru
      _
    %120 = sfence
    %121 = vsyncpa [#allocation4], 1
    %122 = vsyncpa [#allocation7], 1
    %123 = vsyncpa [#allocation5], 1

</llo_original>
